<compile_context>
chip_gen: v7x
topology: tpu7x:2x2x1
jax: 0.10.0
libtpu: 0.0.40
codegen_flags: <defaults>
</compile_context>

<pallas_src>
import numpy as np
import jax
import jax.numpy as jnp
from jax import lax
from jax.experimental import pallas as pl
from jax.experimental.pallas import tpu as pltpu

# ---- synthetic model configuration ------------------------------------------
N_FEATURES = 16
N_CLASSES = 3
N_SUPPORT = (40, 44, 44)                      # per-class support-vector counts
N_SV = sum(N_SUPPORT)                         # 128 (lane aligned)
N_PAIRS = N_CLASSES * (N_CLASSES - 1) // 2    # 3 OVO pairs
N_PAIRS_PAD = 8                               # pad pair rows to a full sublane tile
N_CLASSES_PAD = 8                             # pad class rows to a full sublane tile
GAMMA = 1.0 / N_FEATURES                      # rbf gamma
OVR = True                                    # decision_function_shape == 'ovr'
BREAK_TIES = True
BATCH = 256
CLASS_LABELS = (3, 7, 11)                     # static class labels (baked into kernel)


def pick_block_n(n):
    """v7x (2 TCs): split the batch 2-way; v5e/v6e (1 TC): one grid step."""
    assert n % 128 == 0
    try:
        kind = jax.devices()[0].device_kind.lower()
    except Exception:
        kind = ""
    bn = n // 2 if ("v7" in kind and (n // 2) % 128 == 0) else n
    bn = min(bn, 1024)                         # keep k_t tile well under VMEM limits
    while n % bn:
        bn -= 128
    return bn


# ---- Pallas kernel -----------------------------------------------------------
def make_svc_kernel(n_classes, class_labels, ovr, break_ties, neg_gamma):
    # TODO(synk): the n_classes == 2 shortcut of predict() (ovo > 0) is not
    # implemented; this kernel is specialized for the multiclass OVO/OVR path.

    def svc_kernel(x_ref, svs_ref, svn_ref, pc_ref, b_ref, s_ref, vb_ref, out_ref):
        x = x_ref[...]                                               # (BN, D) f32
        bn = x.shape[0]

        # --- RBF kernel against all support vectors (batch on lanes) ---------
        # svs_ref = 2*gamma*SV, svn_ref = -gamma*||SV||^2 (folded at trace time)
        # expo = min(2g<x,sv> - g||sv||^2 - g||x||^2, 0) == -g*max(dist, 0)
        dots = lax.dot_general(svs_ref[...], x,
                               dimension_numbers=(((1,), (1,)), ((), ())),
                               preferred_element_type=jnp.float32)   # (NSV, BN)
        xsq = x * x
        xnorm_g = lax.dot_general(
            jnp.full((1, x.shape[1]), neg_gamma, jnp.float32), xsq,
            dimension_numbers=(((1,), (1,)), ((), ())),
            preferred_element_type=jnp.float32)                      # (1, BN)
        expo = jnp.minimum(dots + svn_ref[...] + xnorm_g, 0.0)
        k_t = jnp.exp(expo)                                          # (NSV, BN)

        # --- all OVO decision values in one MXU matmul ------------------------
        # pc_ref row k holds dual_coef scattered for pair k (zeros elsewhere);
        # padded rows (k >= n_pairs) are all-zero -> ovo padded rows are 0.
        ovo = jnp.dot(pc_ref[...], k_t,
                      preferred_element_type=jnp.float32) + b_ref[...]   # (8, BN)

        # --- voting + confidence on full (8, BN) tiles -------------------------
        # s_ref[c, k] = +1 if c == i_k, -1 if c == j_k, 0 otherwise (padded cols 0)
        # vb_ref[c]   = #pairs where c is the "j" class (the +1 from 1 - pos)
        pos = (ovo >= 0.0).astype(jnp.float32)
        conf = jnp.dot(s_ref[...], ovo, preferred_element_type=jnp.float32)
        votes = jnp.dot(s_ref[...], pos,
                        preferred_element_type=jnp.float32) + vb_ref[...]
        scores = votes + conf / (3.0 * (jnp.abs(conf) + 1.0))        # (8, BN)
        if not (ovr and break_ties):
            scores = jnp.round(scores)                               # torch round path

        # --- argmax over the real class rows (ties -> lowest index) -----------
        best_score = scores[0:1, :]
        best_idx = jnp.zeros((1, bn), jnp.int32)
        for c in range(1, n_classes):
            row = scores[c:c + 1, :]
            better = row > best_score
            best_score = jnp.where(better, row, best_score)
            best_idx = jnp.where(better, jnp.int32(c), best_idx)

        # --- map class index -> class label (static python constants) ---------
        pred = jnp.full((1, bn), int(class_labels[0]), jnp.int32)
        for c in range(1, n_classes):
            pred = jnp.where(best_idx == c, jnp.int32(int(class_labels[c])), pred)
        out_ref[...] = pred                                          # (1, BN) dense

    return svc_kernel


def svc_predict(x, svs_scaled, svn_neg_gamma, pair_coef_t, intercept_col,
                sign_mat, vote_bias, *, class_labels, gamma=GAMMA,
                n_classes=N_CLASSES, ovr=OVR, break_ties=BREAK_TIES, block_n=None):
    n, d = x.shape
    nsv = svs_scaled.shape[0]
    npad = pair_coef_t.shape[0]
    ncpad = sign_mat.shape[0]
    if block_n is None:
        block_n = pick_block_n(n)
    assert n % block_n == 0 and block_n % 128 == 0

    kernel = make_svc_kernel(n_classes, class_labels, ovr, break_ties, -float(gamma))

    flops = (2 * n * nsv * d + 2 * n * d          # RBF dots + ||x||^2 matmul
             + 2 * n * nsv * npad                 # pair-coefficient matmul
             + 2 * (2 * n * ncpad * npad)         # conf / votes matmuls
             + 8 * n * nsv)                       # elementwise on (NSV, BN)
    bytes_accessed = 4 * (n * d + nsv * d + nsv + npad * nsv + npad
                          + ncpad * npad + ncpad + n)

    out = pl.pallas_call(
        kernel,
        out_shape=jax.ShapeDtypeStruct((1, n), jnp.int32),
        grid=(n // block_n,),
        in_specs=[
            pl.BlockSpec((block_n, d), lambda i: (i, 0)),     # x tile (no wrapper x.T)
            # model constants: constant index_map -> stay VMEM-resident
            pl.BlockSpec((nsv, d), lambda i: (0, 0)),         # 2*gamma * support vecs
            pl.BlockSpec((nsv, 1), lambda i: (0, 0)),         # -gamma * ||sv||^2
            pl.BlockSpec((npad, nsv), lambda i: (0, 0)),      # pair coefficients
            pl.BlockSpec((npad, 1), lambda i: (0, 0)),        # intercepts
            pl.BlockSpec((ncpad, npad), lambda i: (0, 0)),    # +/-1 pair->class signs
            pl.BlockSpec((ncpad, 1), lambda i: (0, 0)),       # vote bias
        ],
        out_specs=pl.BlockSpec((1, block_n), lambda i: (0, i)),   # lane-dense int32
        compiler_params=pltpu.CompilerParams(
            dimension_semantics=("parallel",)),
        cost_estimate=pl.CostEstimate(
            flops=flops, transcendentals=n * nsv, bytes_accessed=bytes_accessed),
    )(x, svs_scaled, svn_neg_gamma, pair_coef_t, intercept_col, sign_mat, vote_bias)
    return out[0, :]                                    # (N,) predicted class labels


# ---- deterministic synthetic SVC parameters ----------------------------------
def build_model(key):
    ksv, kdc, kb = jax.random.split(key, 3)
    support_vectors = jax.random.normal(ksv, (N_SV, N_FEATURES), jnp.float32)
    dual_coef = jax.random.normal(kdc, (N_CLASSES - 1, N_SV), jnp.float32)
    intercept = jax.random.normal(kb, (N_PAIRS,), jnp.float32) * 0.5

    sv_np = np.asarray(support_vectors, np.float32)
    dc = np.asarray(dual_coef, np.float32)
    b_np = np.asarray(intercept, np.float32)
    offsets = np.concatenate([[0], np.cumsum(N_SUPPORT)]).astype(int)

    # Scatter dual_coef so every pairwise dual sum is one row of a single matmul
    # (rows padded to 8 sublanes); also build the pair->class sign matrix and
    # vote bias used by the (8, BN) epilogue matmuls.
    pair_coef_t = np.zeros((N_PAIRS_PAD, N_SV), np.float32)
    intercept_col = np.zeros((N_PAIRS_PAD, 1), np.float32)
    sign_mat = np.zeros((N_CLASSES_PAD, N_PAIRS_PAD), np.float32)
    vote_bias = np.zeros((N_CLASSES_PAD, 1), np.float32)
    k = 0
    for i in range(N_CLASSES - 1):
        for j in range(i + 1, N_CLASSES):
            oi, ci = offsets[i], N_SUPPORT[i]
            oj, cj = offsets[j], N_SUPPORT[j]
            pair_coef_t[k, oi:oi + ci] = dc[j - 1, oi:oi + ci]   # dual_sum(k_out, i, j)
            pair_coef_t[k, oj:oj + cj] = dc[i, oj:oj + cj]       # dual_sum(k_out, j, i)
            intercept_col[k, 0] = b_np[k]
            sign_mat[i, k] = 1.0
            sign_mat[j, k] = -1.0
            vote_bias[j, 0] += 1.0                               # votes[j] += 1 - pos
            k += 1

    # Fold RBF affine constants into the MXU operands (trace time).
    svs_scaled = (2.0 * GAMMA) * sv_np                                   # (NSV, D)
    svn_neg_gamma = (-GAMMA) * (sv_np * sv_np).sum(-1, keepdims=True)    # (NSV, 1)

    return (support_vectors, dual_coef, intercept,
            jnp.asarray(svs_scaled), jnp.asarray(svn_neg_gamma),
            jnp.asarray(pair_coef_t), jnp.asarray(intercept_col),
            jnp.asarray(sign_mat), jnp.asarray(vote_bias))


# ---- plain numpy reference (follows the torch code path literally) -----------
def reference_predict(x, support_vectors, dual_coef, intercept, classes,
                      n_support, gamma, ovr, break_ties):
    x = np.asarray(x, np.float64)
    sv = np.asarray(support_vectors, np.float64)
    dc = np.asarray(dual_coef, np.float64)
    b = np.asarray(intercept, np.float64)
    classes = np.asarray(classes)
    nc = len(n_support)
    offsets = np.concatenate([[0], np.cumsum(n_support)]).astype(int)

    x_norm = (x ** 2).sum(-1)[:, None]
    sv_norm = (sv ** 2).sum(-1)[None, :]
    dists = np.maximum(x_norm + sv_norm - 2.0 * (x @ sv.T), 0.0)
    k_out = np.exp(-gamma * dists)

    n = x.shape[0]
    votes = np.zeros((n, nc))
    confs = np.zeros((n, nc))
    ovos = []
    k = 0
    for i in range(nc - 1):
        for j in range(i + 1, nc):
            def dual_sum(a, bcls):
                row = bcls - 1 if bcls > a else bcls
                off, cnt = offsets[a], n_support[a]
                return k_out[:, off:off + cnt] @ dc[row, off:off + cnt]
            d = dual_sum(i, j) + dual_sum(j, i) + b[k]
            k += 1
            ovos.append(d)
            confs[:, i] += d
            confs[:, j] -= d
            votes[:, i] += (d >= 0)
            votes[:, j] += (d < 0)
    ovo = np.stack(ovos, axis=-1)
    scores = votes + confs / (3.0 * (np.abs(confs) + 1.0))
    if nc == 2:
        idx = (ovo[:, 0] > 0).astype(np.int64)
    elif ovr and break_ties:
        idx = scores.argmax(-1)
    else:
        idx = np.round(scores).argmax(-1)
    pred = classes[idx]

    # Robustness margin: the f32/MXU kernel can only legitimately differ from this
    # f64 reference when an OVO value sits at ~0 (vote flip) or the top-2 class
    # scores are ~tied.  Rows below the margin are excluded from the exact check.
    srt = np.sort(scores, axis=-1)
    gap = srt[:, -1] - srt[:, -2]
    margin = np.minimum(np.abs(ovo).min(-1), gap)
    return pred, margin


if __name__ == "__main__":
    key = jax.random.PRNGKey(0)
    kx, kmodel = jax.random.split(key)

    x = jax.random.normal(kx, (BATCH, N_FEATURES), jnp.float32)
    # TODO(synk): sklearn classes_ are int64; int32 labels are used (TPU-friendly).

    (support_vectors, dual_coef, intercept,
     svs_scaled, svn_neg_gamma, pair_coef_t, intercept_col,
     sign_mat, vote_bias) = build_model(kmodel)

    pred = svc_predict(x, svs_scaled, svn_neg_gamma, pair_coef_t, intercept_col,
                       sign_mat, vote_bias, class_labels=CLASS_LABELS,
                       gamma=GAMMA, n_classes=N_CLASSES)
    pred = np.asarray(jax.block_until_ready(pred))

    ref_pred, margin = reference_predict(
        x, support_vectors, dual_coef, intercept, np.asarray(CLASS_LABELS),
        N_SUPPORT, GAMMA, OVR, BREAK_TIES)

    assert pred.shape == (BATCH,)
    safe = margin > 1e-3                 # skip rows sitting on a decision boundary
    assert safe.mean() > 0.9, "degenerate test: too many boundary rows"
    assert np.array_equal(pred[safe], ref_pred[safe]), (pred, ref_pred, margin)

    print("KERNEL_OK")
</pallas_src>

<mosaic_0001>
module attributes {stable_mosaic.version = 11 : i64} {
  func.func @svc_kernel(%arg0: i32, %arg1: memref<256x16xf32, #tpu.memory_space<vmem>>, %arg2: memref<128x16xf32, #tpu.memory_space<vmem>>, %arg3: memref<128x1xf32, #tpu.memory_space<vmem>>, %arg4: memref<8x128xf32, #tpu.memory_space<vmem>>, %arg5: memref<8x1xf32, #tpu.memory_space<vmem>>, %arg6: memref<8x8xf32, #tpu.memory_space<vmem>>, %arg7: memref<8x1xf32, #tpu.memory_space<vmem>>, %arg8: memref<1x256xi32, #tpu.memory_space<vmem>>) attributes {dimension_semantics = [#tpu.dimension_semantics<parallel>], iteration_bounds = array<i64: 1>, scalar_prefetch = 0 : i64, scratch_operands = 0 : i64, tpu.core_type = #tpu.core_type<tc>, window_params = [{transform_indices = @transform_0, window_bounds = array<i64: 256, 16>}, {pipeline_mode = #tpu.pipeline_mode<synchronous>, transform_indices = @transform_1, window_bounds = array<i64: 128, 16>}, {pipeline_mode = #tpu.pipeline_mode<synchronous>, transform_indices = @transform_2, window_bounds = array<i64: 128, 1>}, {pipeline_mode = #tpu.pipeline_mode<synchronous>, transform_indices = @transform_3, window_bounds = array<i64: 8, 128>}, {pipeline_mode = #tpu.pipeline_mode<synchronous>, transform_indices = @transform_4, window_bounds = array<i64: 8, 1>}, {pipeline_mode = #tpu.pipeline_mode<synchronous>, transform_indices = @transform_5, window_bounds = array<i64: 8, 8>}, {pipeline_mode = #tpu.pipeline_mode<synchronous>, transform_indices = @transform_6, window_bounds = array<i64: 8, 1>}, {transform_indices = @transform_7, window_bounds = array<i64: 1, 256>}]} {
    %c0 = arith.constant 0 : index
    %c0_0 = arith.constant 0 : index
    %0 = vector.load %arg1[%c0, %c0_0] : memref<256x16xf32, #tpu.memory_space<vmem>>, vector<256x16xf32>
    %c0_1 = arith.constant 0 : index
    %c0_2 = arith.constant 0 : index
    %1 = vector.load %arg2[%c0_1, %c0_2] : memref<128x16xf32, #tpu.memory_space<vmem>>, vector<128x16xf32>
    %cst = arith.constant dense<0.000000e+00> : vector<128x256xf32>
    %2 = tpu.matmul %1, %0, %cst {dimension_numbers = #tpu.dot_dimension_numbers<[1], [1], [0], [0], [0, 0, 1, 0], [], []>} : vector<128x16xf32>, vector<256x16xf32>, vector<128x256xf32> -> vector<128x256xf32>
    %3 = arith.mulf %0, %0 : vector<256x16xf32>
    %cst_3 = arith.constant -6.250000e-02 : f32
    %4 = vector.broadcast %cst_3 : f32 to vector<1x16xf32>
    %cst_4 = arith.constant dense<0.000000e+00> : vector<1x256xf32>
    %5 = tpu.matmul %4, %3, %cst_4 {dimension_numbers = #tpu.dot_dimension_numbers<[1], [1], [0], [0], [0, 0, 1, 0], [], []>} : vector<1x16xf32>, vector<256x16xf32>, vector<1x256xf32> -> vector<1x256xf32>
    %c0_5 = arith.constant 0 : index
    %c0_6 = arith.constant 0 : index
    %6 = vector.load %arg3[%c0_5, %c0_6] : memref<128x1xf32, #tpu.memory_space<vmem>>, vector<128x1xf32>
    %7 = vector.broadcast %6 : vector<128x1xf32> to vector<128x256xf32>
    %8 = arith.addf %2, %7 : vector<128x256xf32>
    %9 = vector.broadcast %5 : vector<1x256xf32> to vector<128x256xf32>
    %10 = arith.addf %8, %9 : vector<128x256xf32>
    %cst_7 = arith.constant 0.000000e+00 : f32
    %11 = vector.broadcast %cst_7 : f32 to vector<128x256xf32>
    %12 = arith.minimumf %10, %11 : vector<128x256xf32>
    %13 = math.exp %12 : vector<128x256xf32>
    %c0_8 = arith.constant 0 : index
    %c0_9 = arith.constant 0 : index
    %14 = vector.load %arg4[%c0_8, %c0_9] : memref<8x128xf32, #tpu.memory_space<vmem>>, vector<8x128xf32>
    %cst_10 = arith.constant dense<0.000000e+00> : vector<8x256xf32>
    %15 = tpu.matmul %14, %13, %cst_10 {dimension_numbers = #tpu.dot_dimension_numbers<[1], [0], [0], [1], [0, 0, 1, 1], [], []>} : vector<8x128xf32>, vector<128x256xf32>, vector<8x256xf32> -> vector<8x256xf32>
    %c0_11 = arith.constant 0 : index
    %c0_12 = arith.constant 0 : index
    %16 = vector.load %arg5[%c0_11, %c0_12] : memref<8x1xf32, #tpu.memory_space<vmem>>, vector<8x1xf32>
    %17 = vector.broadcast %16 : vector<8x1xf32> to vector<8x256xf32>
    %18 = arith.addf %15, %17 : vector<8x256xf32>
    %cst_13 = arith.constant 0.000000e+00 : f32
    %19 = vector.broadcast %cst_13 : f32 to vector<8x256xf32>
    %20 = arith.cmpf oge, %18, %19 : vector<8x256xf32>
    %21 = arith.extui %20 : vector<8x256xi1> to vector<8x256xi32>
    %22 = arith.sitofp %21 : vector<8x256xi32> to vector<8x256xf32>
    %c0_14 = arith.constant 0 : index
    %c0_15 = arith.constant 0 : index
    %23 = vector.load %arg6[%c0_14, %c0_15] : memref<8x8xf32, #tpu.memory_space<vmem>>, vector<8x8xf32>
    %cst_16 = arith.constant dense<0.000000e+00> : vector<8x256xf32>
    %24 = tpu.matmul %23, %18, %cst_16 {dimension_numbers = #tpu.dot_dimension_numbers<[1], [0], [0], [1], [0, 0, 1, 1], [], []>} : vector<8x8xf32>, vector<8x256xf32>, vector<8x256xf32> -> vector<8x256xf32>
    %c0_17 = arith.constant 0 : index
    %c0_18 = arith.constant 0 : index
    %25 = vector.load %arg6[%c0_17, %c0_18] : memref<8x8xf32, #tpu.memory_space<vmem>>, vector<8x8xf32>
    %cst_19 = arith.constant dense<0.000000e+00> : vector<8x256xf32>
    %26 = tpu.matmul %25, %22, %cst_19 {dimension_numbers = #tpu.dot_dimension_numbers<[1], [0], [0], [1], [0, 0, 1, 1], [], []>} : vector<8x8xf32>, vector<8x256xf32>, vector<8x256xf32> -> vector<8x256xf32>
    %c0_20 = arith.constant 0 : index
    %c0_21 = arith.constant 0 : index
    %27 = vector.load %arg7[%c0_20, %c0_21] : memref<8x1xf32, #tpu.memory_space<vmem>>, vector<8x1xf32>
    %28 = vector.broadcast %27 : vector<8x1xf32> to vector<8x256xf32>
    %29 = arith.addf %26, %28 : vector<8x256xf32>
    %30 = math.absf %24 : vector<8x256xf32>
    %cst_22 = arith.constant 1.000000e+00 : f32
    %31 = vector.broadcast %cst_22 : f32 to vector<8x256xf32>
    %32 = arith.addf %30, %31 : vector<8x256xf32>
    %cst_23 = arith.constant 3.000000e+00 : f32
    %33 = vector.broadcast %cst_23 : f32 to vector<8x256xf32>
    %34 = arith.mulf %33, %32 : vector<8x256xf32>
    %35 = arith.divf %24, %34 : vector<8x256xf32>
    %36 = arith.addf %29, %35 : vector<8x256xf32>
    %37 = vector.extract_strided_slice %36 {offsets = [0, 0], sizes = [1, 256], strides = [1, 1]} : vector<8x256xf32> to vector<1x256xf32>
    %c0_i32 = arith.constant 0 : i32
    %38 = vector.broadcast %c0_i32 : i32 to vector<1x256xi32>
    %39 = vector.extract_strided_slice %36 {offsets = [1, 0], sizes = [1, 256], strides = [1, 1]} : vector<8x256xf32> to vector<1x256xf32>
    %40 = arith.cmpf ogt, %39, %37 : vector<1x256xf32>
    %41 = arith.select %40, %39, %37 : vector<1x256xi1>, vector<1x256xf32>
    %c1_i32 = arith.constant 1 : i32
    %42 = vector.broadcast %c1_i32 : i32 to vector<1x256xi32>
    %43 = arith.select %40, %42, %38 : vector<1x256xi1>, vector<1x256xi32>
    %44 = vector.extract_strided_slice %36 {offsets = [2, 0], sizes = [1, 256], strides = [1, 1]} : vector<8x256xf32> to vector<1x256xf32>
    %45 = arith.cmpf ogt, %44, %41 : vector<1x256xf32>
    %c2_i32 = arith.constant 2 : i32
    %46 = vector.broadcast %c2_i32 : i32 to vector<1x256xi32>
    %47 = arith.select %45, %46, %43 : vector<1x256xi1>, vector<1x256xi32>
    %c3_i32 = arith.constant 3 : i32
    %48 = vector.broadcast %c3_i32 : i32 to vector<1x256xi32>
    %c1_i32_24 = arith.constant 1 : i32
    %49 = vector.broadcast %c1_i32_24 : i32 to vector<1x256xi32>
    %50 = arith.cmpi eq, %47, %49 : vector<1x256xi32>
    %c7_i32 = arith.constant 7 : i32
    %51 = vector.broadcast %c7_i32 : i32 to vector<1x256xi32>
    %52 = arith.select %50, %51, %48 : vector<1x256xi1>, vector<1x256xi32>
    %c2_i32_25 = arith.constant 2 : i32
    %53 = vector.broadcast %c2_i32_25 : i32 to vector<1x256xi32>
    %54 = arith.cmpi eq, %47, %53 : vector<1x256xi32>
    %c11_i32 = arith.constant 11 : i32
    %55 = vector.broadcast %c11_i32 : i32 to vector<1x256xi32>
    %56 = arith.select %54, %55, %52 : vector<1x256xi1>, vector<1x256xi32>
    %c0_26 = arith.constant 0 : index
    %c0_27 = arith.constant 0 : index
    %57 = vector.load %arg8[%c0_26, %c0_27] : memref<1x256xi32, #tpu.memory_space<vmem>>, vector<1x256xi32>
    tpu.vector_store %arg8[%c0_26, %c0_27], %56 {strides = array<i32>} : memref<1x256xi32, #tpu.memory_space<vmem>>, vector<1x256xi32>,
    return
  }
  func.func @transform_0(%arg0: i32) -> (i32, i32) {
    %c0_i32 = arith.constant 0 : i32
    %c0_i32_0 = arith.constant 0 : i32
    return %arg0, %c0_i32 : i32, i32
  }
  func.func @transform_1(%arg0: i32) -> (i32, i32) {
    %c0_i32 = arith.constant 0 : i32
    %c0_i32_0 = arith.constant 0 : i32
    %c0_i32_1 = arith.constant 0 : i32
    return %c0_i32, %c0_i32_0 : i32, i32
  }
  func.func @transform_2(%arg0: i32) -> (i32, i32) {
    %c0_i32 = arith.constant 0 : i32
    %c0_i32_0 = arith.constant 0 : i32
    %c0_i32_1 = arith.constant 0 : i32
    return %c0_i32, %c0_i32_0 : i32, i32
  }
  func.func @transform_3(%arg0: i32) -> (i32, i32) {
    %c0_i32 = arith.constant 0 : i32
    %c0_i32_0 = arith.constant 0 : i32
    %c0_i32_1 = arith.constant 0 : i32
    return %c0_i32, %c0_i32_0 : i32, i32
  }
  func.func @transform_4(%arg0: i32) -> (i32, i32) {
    %c0_i32 = arith.constant 0 : i32
    %c0_i32_0 = arith.constant 0 : i32
    %c0_i32_1 = arith.constant 0 : i32
    return %c0_i32, %c0_i32_0 : i32, i32
  }
  func.func @transform_5(%arg0: i32) -> (i32, i32) {
    %c0_i32 = arith.constant 0 : i32
    %c0_i32_0 = arith.constant 0 : i32
    %c0_i32_1 = arith.constant 0 : i32
    return %c0_i32, %c0_i32_0 : i32, i32
  }
  func.func @transform_6(%arg0: i32) -> (i32, i32) {
    %c0_i32 = arith.constant 0 : i32
    %c0_i32_0 = arith.constant 0 : i32
    %c0_i32_1 = arith.constant 0 : i32
    return %c0_i32, %c0_i32_0 : i32, i32
  }
  func.func @transform_7(%arg0: i32) -> (i32, i32) {
    %c0_i32 = arith.constant 0 : i32
    %c0_i32_0 = arith.constant 0 : i32
    return %c0_i32, %arg0 : i32, i32
  }
}

</mosaic_0001>

<llo_original>
// kernel: tpu_custom_call.1
$region0: #{tpu_custom_call.1}
  #allocation0 [shape = 'u32[]', space=smem, size = 0x4, offset = 0x4, fixed_abs, tag = 'smem constant byte address 0x4 - core index']
  #allocation1 [shape = 'u32[144,128]{1,0:T(1,128)}', space=vmem, size = 0x12000, scoped, tag = 'internal scratch']
  %s0 = inlined_call_operand.vmem [shape: f32[256,16], index: 0, kind: input, shape index: {}]
  %s1 = inlined_call_operand.vmem [shape: f32[128,16], index: 1, kind: input, shape index: {}]
  %s2 = inlined_call_operand.vmem [shape: f32[128,1], index: 2, kind: input, shape index: {}]
  %s3 = inlined_call_operand.vmem [shape: f32[8,128], index: 3, kind: input, shape index: {}]
  %s4 = inlined_call_operand.vmem [shape: f32[8,1], index: 4, kind: input, shape index: {}]
  %s5 = inlined_call_operand.vmem [shape: f32[8,8], index: 5, kind: input, shape index: {}]
  %s6 = inlined_call_operand.vmem [shape: f32[8,1], index: 6, kind: input, shape index: {}]
  %s7 = inlined_call_operand.hbm [shape: s32[1,256], index: 7, kind: output, shape index: {}]
  %s8 = sld [smem:[#allocation0]]
  $region38: #{tpu_custom_call.1} parent=0
    _
  %s10 = ssub.s32 1, %s8
  %s11 = scalar_select 0, %s10, %s8
  $region1: #{tpu_custom_call.1} parent=0
    #allocation2 [shape = 'u8[1024]{0}', space=vmem, size = 0x400, scoped, tag = 'output window, operand 0, single buffered']
    #allocation3 [shape = 's32[1]{0}', space=sflag, size = 0x4, scoped, tag = 'scoped memory for tpu_custom_call.1']
    %12 = vsyncpa [#allocation3], 0
    // Predicated region
    $region2: #{tpu_custom_call.1} parent=1 // pred_check
      _
    $region3: #{tpu_custom_call.1} parent=1 // pred_check_branch
      %14 = sbr.rel (0) target = $region5
    $region4: #{tpu_custom_call.1} parent=1 // pred_region
      _
    $region5: #{tpu_custom_call.1} parent=1 // pred_fallthru
      _
    // Predicated region
    $region6: #{tpu_custom_call.1} parent=1 // pred_check
      _
    $region7: #{tpu_custom_call.1} parent=1 // pred_check_branch
      %16 = sbr.rel (0) target = $region9
    $region8: #{tpu_custom_call.1} parent=1 // pred_region
      _
    $region9: #{tpu_custom_call.1} parent=1 // pred_fallthru
      _
    // Predicated region
    $region10: #{tpu_custom_call.1} parent=1 // pred_check
      _
    $region11: #{tpu_custom_call.1} parent=1 // pred_check_branch
      %18 = sbr.rel (0) target = $region13
    $region12: #{tpu_custom_call.1} parent=1 // pred_region
      _
    $region13: #{tpu_custom_call.1} parent=1 // pred_fallthru
      _
    // Predicated region
    $region14: #{tpu_custom_call.1} parent=1 // pred_check
      _
    $region15: #{tpu_custom_call.1} parent=1 // pred_check_branch
      %20 = sbr.rel (0) target = $region17
    $region16: #{tpu_custom_call.1} parent=1 // pred_region
      _
    $region17: #{tpu_custom_call.1} parent=1 // pred_fallthru
      _
    // Predicated region
    $region18: #{tpu_custom_call.1} parent=1 // pred_check
      _
    $region19: #{tpu_custom_call.1} parent=1 // pred_check_branch
      %22 = sbr.rel (0) target = $region21
    $region20: #{tpu_custom_call.1} parent=1 // pred_region
      _
    $region21: #{tpu_custom_call.1} parent=1 // pred_fallthru
      _
    // Predicated region
    $region22: #{tpu_custom_call.1} parent=1 // pred_check
      _
    $region23: #{tpu_custom_call.1} parent=1 // pred_check_branch
      %24 = sbr.rel (0) target = $region25
    $region24: #{tpu_custom_call.1} parent=1 // pred_region
      _
    $region25: #{tpu_custom_call.1} parent=1 // pred_fallthru
      _
    // Predicated region
    $region26: #{tpu_custom_call.1} parent=1 // pred_check
      _
    $region27: #{tpu_custom_call.1} parent=1 // pred_check_branch
      %26 = sbr.rel (0) target = $region29
    $region28: #{tpu_custom_call.1} parent=1 // pred_region
      _
    $region29: #{tpu_custom_call.1} parent=1 // pred_fallthru
      _
    %v27 = vld [vmem:[%s0] sm:$0xff]
    %v28 = vld [vmem:[%s0 + $0x8] sm:$0xff]
    %v29 = vld [vmem:[%s0 + $0x10] sm:$0xff]
    %v30 = vld [vmem:[%s0 + $0x18] sm:$0xff]
    %v31 = vld [vmem:[%s0 + $0x20] sm:$0xff]
    %v32 = vld [vmem:[%s0 + $0x28] sm:$0xff]
    %v33 = vld [vmem:[%s0 + $0x30] sm:$0xff]
    %v34 = vld [vmem:[%s0 + $0x38] sm:$0xff]
    %v35 = vld [vmem:[%s0 + $0x40] sm:$0xff]
    %v36 = vld [vmem:[%s0 + $0x48] sm:$0xff]
    %v37 = vld [vmem:[%s0 + $0x50] sm:$0xff]
    %v38 = vld [vmem:[%s0 + $0x58] sm:$0xff]
    %v39 = vld [vmem:[%s0 + $0x60] sm:$0xff]
    %v40 = vld [vmem:[%s0 + $0x68] sm:$0xff]
    %v41 = vld [vmem:[%s0 + $0x70] sm:$0xff]
    %v42 = vld [vmem:[%s0 + $0x78] sm:$0xff]
    %v43 = vld [vmem:[%s0 + $0x80] sm:$0xff]
    %v44 = vld [vmem:[%s0 + $0x88] sm:$0xff]
    %v45 = vld [vmem:[%s0 + $0x90] sm:$0xff]
    %v46 = vld [vmem:[%s0 + $0x98] sm:$0xff]
    %v47 = vld [vmem:[%s0 + $0xa0] sm:$0xff]
    %v48 = vld [vmem:[%s0 + $0xa8] sm:$0xff]
    %v49 = vld [vmem:[%s0 + $0xb0] sm:$0xff]
    %v50 = vld [vmem:[%s0 + $0xb8] sm:$0xff]
    %v51 = vld [vmem:[%s0 + $0xc0] sm:$0xff]
    %v52 = vld [vmem:[%s0 + $0xc8] sm:$0xff]
    %v53 = vld [vmem:[%s0 + $0xd0] sm:$0xff]
    %v54 = vld [vmem:[%s0 + $0xd8] sm:$0xff]
    %v55 = vld [vmem:[%s0 + $0xe0] sm:$0xff]
    %v56 = vld [vmem:[%s0 + $0xe8] sm:$0xff]
    %v57 = vld [vmem:[%s0 + $0xf0] sm:$0xff]
    %v58 = vld [vmem:[%s0 + $0xf8] sm:$0xff]
    %v59 = vld [vmem:[%s1] sm:$0xff]
    %v60 = vld [vmem:[%s1 + $0x8] sm:$0xff]
    %v61 = vld [vmem:[%s1 + $0x10] sm:$0xff]
    %v62 = vld [vmem:[%s1 + $0x18] sm:$0xff]
    %v63 = vld [vmem:[%s1 + $0x20] sm:$0xff]
    %v64 = vld [vmem:[%s1 + $0x28] sm:$0xff]
    %v65 = vld [vmem:[%s1 + $0x30] sm:$0xff]
    %v66 = vld [vmem:[%s1 + $0x38] sm:$0xff]
    %v67 = vld [vmem:[%s1 + $0x40] sm:$0xff]
    %v68 = vld [vmem:[%s1 + $0x48] sm:$0xff]
    %v69 = vld [vmem:[%s1 + $0x50] sm:$0xff]
    %v70 = vld [vmem:[%s1 + $0x58] sm:$0xff]
    %v71 = vld [vmem:[%s1 + $0x60] sm:$0xff]
    %v72 = vld [vmem:[%s1 + $0x68] sm:$0xff]
    %v73 = vld [vmem:[%s1 + $0x70] sm:$0xff]
    %v74 = vld [vmem:[%s1 + $0x78] sm:$0xff]
    %v75 = vmul.f32 %v27, %v27
    %v76 = vmul.f32 %v28, %v28
    %v77 = vmul.f32 %v29, %v29
    %v78 = vmul.f32 %v30, %v30
    %v79 = vmul.f32 %v31, %v31
    %v80 = vmul.f32 %v32, %v32
    %v81 = vmul.f32 %v33, %v33
    %v82 = vmul.f32 %v34, %v34
    %v83 = vmul.f32 %v35, %v35
    %v84 = vmul.f32 %v36, %v36
    %v85 = vmul.f32 %v37, %v37
    %v86 = vmul.f32 %v38, %v38
    %v87 = vmul.f32 %v39, %v39
    %v88 = vmul.f32 %v40, %v40
    %v89 = vmul.f32 %v41, %v41
    %v90 = vmul.f32 %v42, %v42
    %v91 = vmul.f32 %v43, %v43
    %v92 = vmul.f32 %v44, %v44
    %v93 = vmul.f32 %v45, %v45
    %v94 = vmul.f32 %v46, %v46
    %v95 = vmul.f32 %v47, %v47
    %v96 = vmul.f32 %v48, %v48
    %v97 = vmul.f32 %v49, %v49
    %v98 = vmul.f32 %v50, %v50
    %v99 = vmul.f32 %v51, %v51
    %v100 = vmul.f32 %v52, %v52
    %v101 = vmul.f32 %v53, %v53
    %v102 = vmul.f32 %v54, %v54
    %v103 = vmul.f32 %v55, %v55
    %v104 = vmul.f32 %v56, %v56
    %v105 = vmul.f32 %v57, %v57
    %v106 = vmul.f32 %v58, %v58
    %vm107 = vcmask 130048
    %v109 = vsel %vm107, -0.0625, 0
    %v112 = vsel %vm107, %v75, 0
    %v115 = vsel %vm107, %v76, 0
    %v118 = vsel %vm107, %v77, 0
    %v121 = vsel %vm107, %v78, 0
    %v124 = vsel %vm107, %v79, 0
    %v127 = vsel %vm107, %v80, 0
    %v130 = vsel %vm107, %v81, 0
    %v133 = vsel %vm107, %v82, 0
    %v136 = vsel %vm107, %v83, 0
    %v139 = vsel %vm107, %v84, 0
    %v142 = vsel %vm107, %v85, 0
    %v145 = vsel %vm107, %v86, 0
    %v148 = vsel %vm107, %v87, 0
    %v151 = vsel %vm107, %v88, 0
    %v154 = vsel %vm107, %v89, 0
    %v157 = vsel %vm107, %v90, 0
    %v160 = vsel %vm107, %v91, 0
    %v163 = vsel %vm107, %v92, 0
    %v166 = vsel %vm107, %v93, 0
    %v169 = vsel %vm107, %v94, 0
    %v172 = vsel %vm107, %v95, 0
    %v175 = vsel %vm107, %v96, 0
    %v178 = vsel %vm107, %v97, 0
    %v181 = vsel %vm107, %v98, 0
    %v184 = vsel %vm107, %v99, 0
    %v187 = vsel %vm107, %v100, 0
    %v190 = vsel %vm107, %v101, 0
    %v193 = vsel %vm107, %v102, 0
    %v196 = vsel %vm107, %v103, 0
    %v199 = vsel %vm107, %v104, 0
    %v202 = vsel %vm107, %v105, 0
    %v205 = vsel %vm107, %v106, 0
    %207 = vmatprep.subr.mxu0 0.0
    %208 = vmatpush1.xpose.msra.mxu0 %v112
    %209 = vmatprep.subr.mxu0 0.0
    %210 = vmatpush1.xpose.msra.mxu0 %v115
    %211 = vmatprep.subr.mxu0 0.0
    %212 = vmatpush1.xpose.msra.mxu0 %v118
    %213 = vmatprep.subr.mxu0 0.0
    %214 = vmatpush1.xpose.msra.mxu0 %v121
    %215 = vmatprep.subr.mxu0 0.0
    %216 = vmatpush1.xpose.msra.mxu0 %v124
    %217 = vmatprep.subr.mxu0 0.0
    %218 = vmatpush1.xpose.msra.mxu0 %v127
    %219 = vmatprep.subr.mxu0 0.0
    %220 = vmatpush1.xpose.msra.mxu0 %v130
    %221 = vmatprep.subr.mxu0 0.0
    %222 = vmatpush1.xpose.msra.mxu0 %v133
    %223 = vmatprep.subr.mxu0 0.0
    %224 = vmatpush1.xpose.msra.mxu0 %v136
    %225 = vmatprep.subr.mxu0 0.0
    %226 = vmatpush1.xpose.msra.mxu0 %v139
    %227 = vmatprep.subr.mxu0 0.0
    %228 = vmatpush1.xpose.msra.mxu0 %v142
    %229 = vmatprep.subr.mxu0 0.0
    %230 = vmatpush1.xpose.msra.mxu0 %v145
    %231 = vmatprep.subr.mxu0 0.0
    %232 = vmatpush1.xpose.msra.mxu0 %v148
    %233 = vmatprep.subr.mxu0 0.0
    %234 = vmatpush1.xpose.msra.mxu0 %v151
    %235 = vmatprep.subr.mxu0 0.0
    %236 = vmatpush1.xpose.msra.mxu0 %v154
    %237 = vmatprep.subr.mxu0 0.0
    %238 = vmatpush1.xpose.msra.mxu0 %v157
    %239 = vmatprep.subr.mxu0 0.0
    %240 = vmatpush1.xpose.msra.mxu0 %v160
    %241 = vmatprep.subr.mxu0 0.0
    %242 = vmatpush1.xpose.msra.mxu0 %v163
    %243 = vmatprep.subr.mxu0 0.0
    %244 = vmatpush1.xpose.msra.mxu0 %v166
    %245 = vmatprep.subr.mxu0 0.0
    %246 = vmatpush1.xpose.msra.mxu0 %v169
    %247 = vmatprep.subr.mxu0 0.0
    %248 = vmatpush1.xpose.msra.mxu0 %v172
    %249 = vmatprep.subr.mxu0 0.0
    %250 = vmatpush1.xpose.msra.mxu0 %v175
    %251 = vmatprep.subr.mxu0 0.0
    %252 = vmatpush1.xpose.msra.mxu0 %v178
    %253 = vmatprep.subr.mxu0 0.0
    %254 = vmatpush1.xpose.msra.mxu0 %v181
    %255 = vmatprep.subr.mxu0 0.0
    %256 = vmatpush1.xpose.msra.mxu0 %v184
    %257 = vmatprep.subr.mxu0 0.0
    %258 = vmatpush1.xpose.msra.mxu0 %v187
    %259 = vmatprep.subr.mxu0 0.0
    %260 = vmatpush1.xpose.msra.mxu0 %v190
    %261 = vmatprep.subr.mxu0 0.0
    %262 = vmatpush1.xpose.msra.mxu0 %v193
    %263 = vmatprep.subr.mxu0 0.0
    %264 = vmatpush1.xpose.msra.mxu0 %v196
    %265 = vmatprep.subr.mxu0 0.0
    %266 = vmatpush1.xpose.msra.mxu0 %v199
    %267 = vmatprep.subr.mxu0 0.0
    %268 = vmatpush1.xpose.msra.mxu0 %v202
    %269 = vmatprep.subr.mxu0 0.0
    %270 = vmatpush1.xpose.msra.mxu0 %v205
    %271 = vmatprep.mubr.f32.mxu0 0.0
    %272 = vmatmul.mubr.f32.gmra.mrb[0].mxu0 %v109
    %v273 = vpop.f32.mrb[0].mxu0
    %v274 = vadd.f32 0.0, %v273
    %v275 = vpop.f32.mrb[0].mxu0
    %v276 = vadd.f32 0.0, %v275
    %277 = vdwg.mxu0
    %v278 = vld [vmem:[%s2] sm:$0xff]
    %v279 = vld [vmem:[%s2 + $0x8] sm:$0xff]
    %v280 = vld [vmem:[%s2 + $0x10] sm:$0xff]
    %v281 = vld [vmem:[%s2 + $0x18] sm:$0xff]
    %v282 = vld [vmem:[%s2 + $0x20] sm:$0xff]
    %v283 = vld [vmem:[%s2 + $0x28] sm:$0xff]
    %v284 = vld [vmem:[%s2 + $0x30] sm:$0xff]
    %v285 = vld [vmem:[%s2 + $0x38] sm:$0xff]
    %v286 = vld [vmem:[%s2 + $0x40] sm:$0xff]
    %v287 = vld [vmem:[%s2 + $0x48] sm:$0xff]
    %v288 = vld [vmem:[%s2 + $0x50] sm:$0xff]
    %v289 = vld [vmem:[%s2 + $0x58] sm:$0xff]
    %v290 = vld [vmem:[%s2 + $0x60] sm:$0xff]
    %v291 = vld [vmem:[%s2 + $0x68] sm:$0xff]
    %v292 = vld [vmem:[%s2 + $0x70] sm:$0xff]
    %v293 = vld [vmem:[%s2 + $0x78] sm:$0xff]
    %295 = vset.pattern.permute.xlu0 0
    %296 = vperm.xlu0 %295, %v278
    %v297 = vpop.permute.xlu0 %296
    %300 = vset.pattern.permute.xlu0 0
    %301 = vperm.xlu0 %300, %v279
    %v302 = vpop.permute.xlu0 %301
    %305 = vset.pattern.permute.xlu0 0
    %306 = vperm.xlu0 %305, %v280
    %v307 = vpop.permute.xlu0 %306
    %310 = vset.pattern.permute.xlu0 0
    %311 = vperm.xlu0 %310, %v281
    %v312 = vpop.permute.xlu0 %311
    %315 = vset.pattern.permute.xlu0 0
    %316 = vperm.xlu0 %315, %v282
    %v317 = vpop.permute.xlu0 %316
    %320 = vset.pattern.permute.xlu0 0
    %321 = vperm.xlu0 %320, %v283
    %v322 = vpop.permute.xlu0 %321
    %325 = vset.pattern.permute.xlu0 0
    %326 = vperm.xlu0 %325, %v284
    %v327 = vpop.permute.xlu0 %326
    %330 = vset.pattern.permute.xlu0 0
    %331 = vperm.xlu0 %330, %v285
    %v332 = vpop.permute.xlu0 %331
    %335 = vset.pattern.permute.xlu0 0
    %336 = vperm.xlu0 %335, %v286
    %v337 = vpop.permute.xlu0 %336
    %340 = vset.pattern.permute.xlu0 0
    %341 = vperm.xlu0 %340, %v287
    %v342 = vpop.permute.xlu0 %341
    %345 = vset.pattern.permute.xlu0 0
    %346 = vperm.xlu0 %345, %v288
    %v347 = vpop.permute.xlu0 %346
    %350 = vset.pattern.permute.xlu0 0
    %351 = vperm.xlu0 %350, %v289
    %v352 = vpop.permute.xlu0 %351
    %355 = vset.pattern.permute.xlu0 0
    %356 = vperm.xlu0 %355, %v290
    %v357 = vpop.permute.xlu0 %356
    %360 = vset.pattern.permute.xlu0 0
    %361 = vperm.xlu0 %360, %v291
    %v362 = vpop.permute.xlu0 %361
    %365 = vset.pattern.permute.xlu0 0
    %366 = vperm.xlu0 %365, %v292
    %v367 = vpop.permute.xlu0 %366
    %370 = vset.pattern.permute.xlu0 0
    %371 = vperm.xlu0 %370, %v293
    %v372 = vpop.permute.xlu0 %371
    %v375 = vsel %vm107, %v59, 0
    %v378 = vsel %vm107, %v60, 0
    %v381 = vsel %vm107, %v61, 0
    %v384 = vsel %vm107, %v62, 0
    %v387 = vsel %vm107, %v63, 0
    %v390 = vsel %vm107, %v64, 0
    %v393 = vsel %vm107, %v65, 0
    %v396 = vsel %vm107, %v66, 0
    %v399 = vsel %vm107, %v67, 0
    %v402 = vsel %vm107, %v68, 0
    %v405 = vsel %vm107, %v69, 0
    %v408 = vsel %vm107, %v70, 0
    %v411 = vsel %vm107, %v71, 0
    %v414 = vsel %vm107, %v72, 0
    %v417 = vsel %vm107, %v73, 0
    %v420 = vsel %vm107, %v74, 0
    %v423 = vsel %vm107, %v27, 0
    %v426 = vsel %vm107, %v28, 0
    %v429 = vsel %vm107, %v29, 0
    %v432 = vsel %vm107, %v30, 0
    %v435 = vsel %vm107, %v31, 0
    %v438 = vsel %vm107, %v32, 0
    %v441 = vsel %vm107, %v33, 0
    %v444 = vsel %vm107, %v34, 0
    %v447 = vsel %vm107, %v35, 0
    %v450 = vsel %vm107, %v36, 0
    %v453 = vsel %vm107, %v37, 0
    %v456 = vsel %vm107, %v38, 0
    %v459 = vsel %vm107, %v39, 0
    %v462 = vsel %vm107, %v40, 0
    %v465 = vsel %vm107, %v41, 0
    %v468 = vsel %vm107, %v42, 0
    %v471 = vsel %vm107, %v43, 0
    %v474 = vsel %vm107, %v44, 0
    %v477 = vsel %vm107, %v45, 0
    %v480 = vsel %vm107, %v46, 0
    %v483 = vsel %vm107, %v47, 0
    %v486 = vsel %vm107, %v48, 0
    %v489 = vsel %vm107, %v49, 0
    %v492 = vsel %vm107, %v50, 0
    %v495 = vsel %vm107, %v51, 0
    %v498 = vsel %vm107, %v52, 0
    %v501 = vsel %vm107, %v53, 0
    %v504 = vsel %vm107, %v54, 0
    %v507 = vsel %vm107, %v55, 0
    %v510 = vsel %vm107, %v56, 0
    %v513 = vsel %vm107, %v57, 0
    %v516 = vsel %vm107, %v58, 0
    %518 = vmatprep.subr.mxu0 0.0
    %519 = vmatpush1.xpose.msra.mxu0 %v423
    %520 = vmatprep.subr.mxu0 0.0
    %521 = vmatpush1.xpose.msra.mxu0 %v426
    %522 = vmatprep.subr.mxu0 0.0
    %523 = vmatpush1.xpose.msra.mxu0 %v429
    %524 = vmatprep.subr.mxu0 0.0
    %525 = vmatpush1.xpose.msra.mxu0 %v432
    %526 = vmatprep.subr.mxu0 0.0
    %527 = vmatpush1.xpose.msra.mxu0 %v435
    %528 = vmatprep.subr.mxu0 0.0
    %529 = vmatpush1.xpose.msra.mxu0 %v438
    %530 = vmatprep.subr.mxu0 0.0
    %531 = vmatpush1.xpose.msra.mxu0 %v441
    %532 = vmatprep.subr.mxu0 0.0
    %533 = vmatpush1.xpose.msra.mxu0 %v444
    %534 = vmatprep.subr.mxu0 0.0
    %535 = vmatpush1.xpose.msra.mxu0 %v447
    %536 = vmatprep.subr.mxu0 0.0
    %537 = vmatpush1.xpose.msra.mxu0 %v450
    %538 = vmatprep.subr.mxu0 0.0
    %539 = vmatpush1.xpose.msra.mxu0 %v453
    %540 = vmatprep.subr.mxu0 0.0
    %541 = vmatpush1.xpose.msra.mxu0 %v456
    %542 = vmatprep.subr.mxu0 0.0
    %543 = vmatpush1.xpose.msra.mxu0 %v459
    %544 = vmatprep.subr.mxu0 0.0
    %545 = vmatpush1.xpose.msra.mxu0 %v462
    %546 = vmatprep.subr.mxu0 0.0
    %547 = vmatpush1.xpose.msra.mxu0 %v465
    %548 = vmatprep.subr.mxu0 0.0
    %549 = vmatpush1.xpose.msra.mxu0 %v468
    %550 = vmatprep.subr.mxu0 0.0
    %551 = vmatpush1.xpose.msra.mxu0 %v471
    %552 = vmatprep.subr.mxu0 0.0
    %553 = vmatpush1.xpose.msra.mxu0 %v474
    %554 = vmatprep.subr.mxu0 0.0
    %555 = vmatpush1.xpose.msra.mxu0 %v477
    %556 = vmatprep.subr.mxu0 0.0
    %557 = vmatpush1.xpose.msra.mxu0 %v480
    %558 = vmatprep.subr.mxu0 0.0
    %559 = vmatpush1.xpose.msra.mxu0 %v483
    %560 = vmatprep.subr.mxu0 0.0
    %561 = vmatpush1.xpose.msra.mxu0 %v486
    %562 = vmatprep.subr.mxu0 0.0
    %563 = vmatpush1.xpose.msra.mxu0 %v489
    %564 = vmatprep.subr.mxu0 0.0
    %565 = vmatpush1.xpose.msra.mxu0 %v492
    %566 = vmatprep.subr.mxu0 0.0
    %567 = vmatpush1.xpose.msra.mxu0 %v495
    %568 = vmatprep.subr.mxu0 0.0
    %569 = vmatpush1.xpose.msra.mxu0 %v498
    %570 = vmatprep.subr.mxu0 0.0
    %571 = vmatpush1.xpose.msra.mxu0 %v501
    %572 = vmatprep.subr.mxu0 0.0
    %573 = vmatpush1.xpose.msra.mxu0 %v504
    %574 = vmatprep.subr.mxu0 0.0
    %575 = vmatpush1.xpose.msra.mxu0 %v507
    %576 = vmatprep.subr.mxu0 0.0
    %577 = vmatpush1.xpose.msra.mxu0 %v510
    %578 = vmatprep.subr.mxu0 0.0
    %579 = vmatpush1.xpose.msra.mxu0 %v513
    %580 = vmatprep.subr.mxu0 0.0
    %581 = vmatpush1.xpose.msra.mxu0 %v516
    %582 = vmatprep.mubr.f32.mxu0 0.0
    %583 = vmatmul.mubr.f32.gmra.mrb[0].mxu0 %v375
    %v584 = vpop.f32.mrb[0].mxu0
    %v585 = vadd.f32 %v297, %v584
    %v586 = vpop.f32.mrb[0].mxu0
    %v587 = vadd.f32 %v297, %v586
    %588 = vmatprep.mubr.f32.mxu0 0.0
    %589 = vmatmul.mubr.f32.gmra.mrb[0].mxu0 %v378
    %v590 = vpop.f32.mrb[0].mxu0
    %v591 = vadd.f32 %v302, %v590
    %v592 = vpop.f32.mrb[0].mxu0
    %v593 = vadd.f32 %v302, %v592
    %594 = vmatprep.mubr.f32.mxu0 0.0
    %595 = vmatmul.mubr.f32.gmra.mrb[0].mxu0 %v381
    %v596 = vpop.f32.mrb[0].mxu0
    %v597 = vadd.f32 %v307, %v596
    %v598 = vpop.f32.mrb[0].mxu0
    %v599 = vadd.f32 %v307, %v598
    %600 = vmatprep.mubr.f32.mxu0 0.0
    %601 = vmatmul.mubr.f32.gmra.mrb[0].mxu0 %v384
    %v602 = vpop.f32.mrb[0].mxu0
    %v603 = vadd.f32 %v312, %v602
    %v604 = vpop.f32.mrb[0].mxu0
    %v605 = vadd.f32 %v312, %v604
    %606 = vmatprep.mubr.f32.mxu0 0.0
    %607 = vmatmul.mubr.f32.gmra.mrb[0].mxu0 %v387
    %v608 = vpop.f32.mrb[0].mxu0
    %v609 = vadd.f32 %v317, %v608
    %v610 = vpop.f32.mrb[0].mxu0
    %v611 = vadd.f32 %v317, %v610
    %612 = vmatprep.mubr.f32.mxu0 0.0
    %613 = vmatmul.mubr.f32.gmra.mrb[0].mxu0 %v390
    %v614 = vpop.f32.mrb[0].mxu0
    %v615 = vadd.f32 %v322, %v614
    %v616 = vpop.f32.mrb[0].mxu0
    %v617 = vadd.f32 %v322, %v616
    %618 = vmatprep.mubr.f32.mxu0 0.0
    %619 = vmatmul.mubr.f32.gmra.mrb[0].mxu0 %v393
    %v620 = vpop.f32.mrb[0].mxu0
    %v621 = vadd.f32 %v327, %v620
    %v622 = vpop.f32.mrb[0].mxu0
    %v623 = vadd.f32 %v327, %v622
    %624 = vmatprep.mubr.f32.mxu0 0.0
    %625 = vmatmul.mubr.f32.gmra.mrb[0].mxu0 %v396
    %v626 = vpop.f32.mrb[0].mxu0
    %v627 = vadd.f32 %v332, %v626
    %v628 = vpop.f32.mrb[0].mxu0
    %v629 = vadd.f32 %v332, %v628
    %630 = vmatprep.mubr.f32.mxu0 0.0
    %631 = vmatmul.mubr.f32.gmra.mrb[0].mxu0 %v399
    %v632 = vpop.f32.mrb[0].mxu0
    %v633 = vadd.f32 %v337, %v632
    %v634 = vpop.f32.mrb[0].mxu0
    %v635 = vadd.f32 %v337, %v634
    %636 = vmatprep.mubr.f32.mxu0 0.0
    %637 = vmatmul.mubr.f32.gmra.mrb[0].mxu0 %v402
    %v638 = vpop.f32.mrb[0].mxu0
    %v639 = vadd.f32 %v342, %v638
    %v640 = vpop.f32.mrb[0].mxu0
    %v641 = vadd.f32 %v342, %v640
    %642 = vmatprep.mubr.f32.mxu0 0.0
    %643 = vmatmul.mubr.f32.gmra.mrb[0].mxu0 %v405
    %v644 = vpop.f32.mrb[0].mxu0
    %v645 = vadd.f32 %v347, %v644
    %v646 = vpop.f32.mrb[0].mxu0
    %v647 = vadd.f32 %v347, %v646
    %648 = vmatprep.mubr.f32.mxu0 0.0
    %649 = vmatmul.mubr.f32.gmra.mrb[0].mxu0 %v408
    %v650 = vpop.f32.mrb[0].mxu0
    %v651 = vadd.f32 %v352, %v650
    %v652 = vpop.f32.mrb[0].mxu0
    %v653 = vadd.f32 %v352, %v652
    %654 = vmatprep.mubr.f32.mxu0 0.0
    %655 = vmatmul.mubr.f32.gmra.mrb[0].mxu0 %v411
    %v656 = vpop.f32.mrb[0].mxu0
    %v657 = vadd.f32 %v357, %v656
    %v658 = vpop.f32.mrb[0].mxu0
    %v659 = vadd.f32 %v357, %v658
    %660 = vmatprep.mubr.f32.mxu0 0.0
    %661 = vmatmul.mubr.f32.gmra.mrb[0].mxu0 %v414
    %v662 = vpop.f32.mrb[0].mxu0
    %v663 = vadd.f32 %v362, %v662
    %v664 = vpop.f32.mrb[0].mxu0
    %v665 = vadd.f32 %v362, %v664
    %666 = vmatprep.mubr.f32.mxu0 0.0
    %667 = vmatmul.mubr.f32.gmra.mrb[0].mxu0 %v417
    %v668 = vpop.f32.mrb[0].mxu0
    %v669 = vadd.f32 %v367, %v668
    %v670 = vpop.f32.mrb[0].mxu0
    %v671 = vadd.f32 %v367, %v670
    %672 = vmatprep.mubr.f32.mxu0 0.0
    %673 = vmatmul.mubr.f32.gmra.mrb[0].mxu0 %v420
    %v674 = vpop.f32.mrb[0].mxu0
    %v675 = vadd.f32 %v372, %v674
    %v676 = vpop.f32.mrb[0].mxu0
    %v677 = vadd.f32 %v372, %v676
    %678 = vdwg.mxu0
    %v679 = vlaneseq
    %v680 = vshrl.u32 %v679, 7
    %v681 = vsub.s32 0, %v680
    %v682 = vrot.slane %v274, %v681
    %v683 = vlaneseq
    %v684 = vshrl.u32 %v683, 7
    %v685 = vsub.s32 0, %v684
    %v686 = vrot.slane %v276, %v685
    %v687 = vadd.f32 %v585, %v682
    %v688 = vadd.f32 %v587, %v686
    %v689 = vadd.f32 %v591, %v682
    %v690 = vadd.f32 %v593, %v686
    %v691 = vadd.f32 %v597, %v682
    %v692 = vadd.f32 %v599, %v686
    %v693 = vadd.f32 %v603, %v682
    %v694 = vadd.f32 %v605, %v686
    %v695 = vadd.f32 %v609, %v682
    %v696 = vadd.f32 %v611, %v686
    %v697 = vadd.f32 %v615, %v682
    %v698 = vadd.f32 %v617, %v686
    %v699 = vadd.f32 %v621, %v682
    %v700 = vadd.f32 %v623, %v686
    %v701 = vadd.f32 %v627, %v682
    %v702 = vadd.f32 %v629, %v686
    %v703 = vadd.f32 %v633, %v682
    %v704 = vadd.f32 %v635, %v686
    %v705 = vadd.f32 %v639, %v682
    %v706 = vadd.f32 %v641, %v686
    %v707 = vadd.f32 %v645, %v682
    %v708 = vadd.f32 %v647, %v686
    %v709 = vadd.f32 %v651, %v682
    %v710 = vadd.f32 %v653, %v686
    %v711 = vadd.f32 %v657, %v682
    %v712 = vadd.f32 %v659, %v686
    %v713 = vadd.f32 %v663, %v682
    %v714 = vadd.f32 %v665, %v686
    %v715 = vadd.f32 %v669, %v682
    %v716 = vadd.f32 %v671, %v686
    %v717 = vadd.f32 %v675, %v682
    %v718 = vadd.f32 %v677, %v686
    %v719 = vmin.f32 %v687, 0.0
    %v720 = vmin.f32 %v688, 0.0
    %v721 = vmin.f32 %v689, 0.0
    %v722 = vmin.f32 %v690, 0.0
    %v723 = vmin.f32 %v691, 0.0
    %v724 = vmin.f32 %v692, 0.0
    %v725 = vmin.f32 %v693, 0.0
    %v726 = vmin.f32 %v694, 0.0
    %v727 = vmin.f32 %v695, 0.0
    %v728 = vmin.f32 %v696, 0.0
    %v729 = vmin.f32 %v697, 0.0
    %v730 = vmin.f32 %v698, 0.0
    %v731 = vmin.f32 %v699, 0.0
    %v732 = vmin.f32 %v700, 0.0
    %v733 = vmin.f32 %v701, 0.0
    %v734 = vmin.f32 %v702, 0.0
    %v735 = vmin.f32 %v703, 0.0
    %v736 = vmin.f32 %v704, 0.0
    %v737 = vmin.f32 %v705, 0.0
    %v738 = vmin.f32 %v706, 0.0
    %v739 = vmin.f32 %v707, 0.0
    %v740 = vmin.f32 %v708, 0.0
    %v741 = vmin.f32 %v709, 0.0
    %v742 = vmin.f32 %v710, 0.0
    %v743 = vmin.f32 %v711, 0.0
    %v744 = vmin.f32 %v712, 0.0
    %v745 = vmin.f32 %v713, 0.0
    %v746 = vmin.f32 %v714, 0.0
    %v747 = vmin.f32 %v715, 0.0
    %v748 = vmin.f32 %v716, 0.0
    %v749 = vmin.f32 %v717, 0.0
    %v750 = vmin.f32 %v718, 0.0
    %v751 = vmul.f32 %v719, 1.442695
    %v752 = vpow.pop %v751
    %v753 = vmul.f32 %v720, 1.442695
    %v754 = vpow.pop %v753
    %v755 = vmul.f32 %v721, 1.442695
    %v756 = vpow.pop %v755
    %v757 = vmul.f32 %v722, 1.442695
    %v758 = vpow.pop %v757
    %v759 = vmul.f32 %v723, 1.442695
    %v760 = vpow.pop %v759
    %v761 = vmul.f32 %v724, 1.442695
    %v762 = vpow.pop %v761
    %v763 = vmul.f32 %v725, 1.442695
    %v764 = vpow.pop %v763
    %v765 = vmul.f32 %v726, 1.442695
    %v766 = vpow.pop %v765
    %v767 = vmul.f32 %v727, 1.442695
    %v768 = vpow.pop %v767
    %v769 = vmul.f32 %v728, 1.442695
    %v770 = vpow.pop %v769
    %v771 = vmul.f32 %v729, 1.442695
    %v772 = vpow.pop %v771
    %v773 = vmul.f32 %v730, 1.442695
    %v774 = vpow.pop %v773
    %v775 = vmul.f32 %v731, 1.442695
    %v776 = vpow.pop %v775
    %v777 = vmul.f32 %v732, 1.442695
    %v778 = vpow.pop %v777
    %v779 = vmul.f32 %v733, 1.442695
    %v780 = vpow.pop %v779
    %v781 = vmul.f32 %v734, 1.442695
    %v782 = vpow.pop %v781
    %v783 = vmul.f32 %v735, 1.442695
    %v784 = vpow.pop %v783
    %v785 = vmul.f32 %v736, 1.442695
    %v786 = vpow.pop %v785
    %v787 = vmul.f32 %v737, 1.442695
    %v788 = vpow.pop %v787
    %v789 = vmul.f32 %v738, 1.442695
    %v790 = vpow.pop %v789
    %v791 = vmul.f32 %v739, 1.442695
    %v792 = vpow.pop %v791
    %v793 = vmul.f32 %v740, 1.442695
    %v794 = vpow.pop %v793
    %v795 = vmul.f32 %v741, 1.442695
    %v796 = vpow.pop %v795
    %v797 = vmul.f32 %v742, 1.442695
    %v798 = vpow.pop %v797
    %v799 = vmul.f32 %v743, 1.442695
    %v800 = vpow.pop %v799
    %v801 = vmul.f32 %v744, 1.442695
    %v802 = vpow.pop %v801
    %v803 = vmul.f32 %v745, 1.442695
    %v804 = vpow.pop %v803
    %v805 = vmul.f32 %v746, 1.442695
    %v806 = vpow.pop %v805
    %v807 = vmul.f32 %v747, 1.442695
    %v808 = vpow.pop %v807
    %v809 = vmul.f32 %v748, 1.442695
    %v810 = vpow.pop %v809
    %v811 = vmul.f32 %v749, 1.442695
    %v812 = vpow.pop %v811
    %v813 = vmul.f32 %v750, 1.442695
    %v814 = vpow.pop %v813
    %v815 = vld [vmem:[%s3] sm:$0xff]
    %v816 = vld [vmem:[%s4] sm:$0xff]
    %818 = vset.pattern.permute.xlu0 0
    %819 = vperm.xlu0 %818, %v816
    %v820 = vpop.permute.xlu0 %819
    %822 = vmatprep.subr.mxu0 %v754
    %823 = vmatpush1.msra.mxu0 %v752
    %824 = vmatprep.subr.mxu0 %v758
    %825 = vmatpush1.msra.mxu0 %v756
    %826 = vmatprep.subr.mxu0 %v762
    %827 = vmatpush1.msra.mxu0 %v760
    %828 = vmatprep.subr.mxu0 %v766
    %829 = vmatpush1.msra.mxu0 %v764
    %830 = vmatprep.subr.mxu0 %v770
    %831 = vmatpush1.msra.mxu0 %v768
    %832 = vmatprep.subr.mxu0 %v774
    %833 = vmatpush1.msra.mxu0 %v772
    %834 = vmatprep.subr.mxu0 %v778
    %835 = vmatpush1.msra.mxu0 %v776
    %836 = vmatprep.subr.mxu0 %v782
    %837 = vmatpush1.msra.mxu0 %v780
    %838 = vmatprep.subr.mxu0 %v786
    %839 = vmatpush1.msra.mxu0 %v784
    %840 = vmatprep.subr.mxu0 %v790
    %841 = vmatpush1.msra.mxu0 %v788
    %842 = vmatprep.subr.mxu0 %v794
    %843 = vmatpush1.msra.mxu0 %v792
    %844 = vmatprep.subr.mxu0 %v798
    %845 = vmatpush1.msra.mxu0 %v796
    %846 = vmatprep.subr.mxu0 %v802
    %847 = vmatpush1.msra.mxu0 %v800
    %848 = vmatprep.subr.mxu0 %v806
    %849 = vmatpush1.msra.mxu0 %v804
    %850 = vmatprep.subr.mxu0 %v810
    %851 = vmatpush1.msra.mxu0 %v808
    %852 = vmatprep.subr.mxu0 %v814
    %853 = vmatpush1.msra.mxu0 %v812
    %854 = vmatprep.subr.mxu0 0.0
    %855 = vmatpush1.msra.mxu0 0.0
    %856 = vmatprep.subr.mxu0 0.0
    %857 = vmatpush1.msra.mxu0 0.0
    %858 = vmatprep.subr.mxu0 0.0
    %859 = vmatpush1.msra.mxu0 0.0
    %860 = vmatprep.subr.mxu0 0.0
    %861 = vmatpush1.msra.mxu0 0.0
    %862 = vmatprep.subr.mxu0 0.0
    %863 = vmatpush1.msra.mxu0 0.0
    %864 = vmatprep.subr.mxu0 0.0
    %865 = vmatpush1.msra.mxu0 0.0
    %866 = vmatprep.subr.mxu0 0.0
    %867 = vmatpush1.msra.mxu0 0.0
    %868 = vmatprep.subr.mxu0 0.0
    %869 = vmatpush1.msra.mxu0 0.0
    %870 = vmatprep.subr.mxu0 0.0
    %871 = vmatpush1.msra.mxu0 0.0
    %872 = vmatprep.subr.mxu0 0.0
    %873 = vmatpush1.msra.mxu0 0.0
    %874 = vmatprep.subr.mxu0 0.0
    %875 = vmatpush1.msra.mxu0 0.0
    %876 = vmatprep.subr.mxu0 0.0
    %877 = vmatpush1.msra.mxu0 0.0
    %878 = vmatprep.subr.mxu0 0.0
    %879 = vmatpush1.msra.mxu0 0.0
    %880 = vmatprep.subr.mxu0 0.0
    %881 = vmatpush1.msra.mxu0 0.0
    %882 = vmatprep.subr.mxu0 0.0
    %883 = vmatpush1.msra.mxu0 0.0
    %884 = vmatprep.subr.mxu0 0.0
    %885 = vmatpush1.msra.mxu0 0.0
    %886 = vmatprep.mubr.f32.mxu0 0.0
    %887 = vmatmul.mubr.f32.gmra.mrb[0].mxu0 %v815
    %v888 = vpop.f32.mrb[0].mxu0
    %v889 = vadd.f32 %v820, %v888
    %v890 = vpop.f32.mrb[0].mxu0
    %v891 = vadd.f32 %v820, %v890
    %892 = vdwg.mxu0
    %vm893 = vcmp.ge.f32.partialorder %v889, 0.0
    %vm894 = vcmp.ge.f32.partialorder %v891, 0.0
    %v895 = vsel %vm893, 1, 0
    %v896 = vsel %vm894, 1, 0
    %v897 = vcvt.s32.f32 %v895
    %v898 = vcvt.s32.f32 %v896
    %v899 = vld [vmem:[%s5] sm:$0xff]
    %vm900 = vcmask 64512
    %v902 = vsel %vm900, %v899, 0
    %904 = vmatprep.subr.mxu0 %v891
    %905 = vmatpush1.msra.mxu0 %v889
    %906 = vmatprep.subr.mxu0 0.0
    %907 = vmatpush1.msra.mxu0 0.0
    %908 = vmatprep.subr.mxu0 0.0
    %909 = vmatpush1.msra.mxu0 0.0
    %910 = vmatprep.subr.mxu0 0.0
    %911 = vmatpush1.msra.mxu0 0.0
    %912 = vmatprep.subr.mxu0 0.0
    %913 = vmatpush1.msra.mxu0 0.0
    %914 = vmatprep.subr.mxu0 0.0
    %915 = vmatpush1.msra.mxu0 0.0
    %916 = vmatprep.subr.mxu0 0.0
    %917 = vmatpush1.msra.mxu0 0.0
    %918 = vmatprep.subr.mxu0 0.0
    %919 = vmatpush1.msra.mxu0 0.0
    %920 = vmatprep.subr.mxu0 0.0
    %921 = vmatpush1.msra.mxu0 0.0
    %922 = vmatprep.subr.mxu0 0.0
    %923 = vmatpush1.msra.mxu0 0.0
    %924 = vmatprep.subr.mxu0 0.0
    %925 = vmatpush1.msra.mxu0 0.0
    %926 = vmatprep.subr.mxu0 0.0
    %927 = vmatpush1.msra.mxu0 0.0
    %928 = vmatprep.subr.mxu0 0.0
    %929 = vmatpush1.msra.mxu0 0.0
    %930 = vmatprep.subr.mxu0 0.0
    %931 = vmatpush1.msra.mxu0 0.0
    %932 = vmatprep.subr.mxu0 0.0
    %933 = vmatpush1.msra.mxu0 0.0
    %934 = vmatprep.subr.mxu0 0.0
    %935 = vmatpush1.msra.mxu0 0.0
    %936 = vmatprep.subr.mxu0 0.0
    %937 = vmatpush1.msra.mxu0 0.0
    %938 = vmatprep.subr.mxu0 0.0
    %939 = vmatpush1.msra.mxu0 0.0
    %940 = vmatprep.subr.mxu0 0.0
    %941 = vmatpush1.msra.mxu0 0.0
    %942 = vmatprep.subr.mxu0 0.0
    %943 = vmatpush1.msra.mxu0 0.0
    %944 = vmatprep.subr.mxu0 0.0
    %945 = vmatpush1.msra.mxu0 0.0
    %946 = vmatprep.subr.mxu0 0.0
    %947 = vmatpush1.msra.mxu0 0.0
    %948 = vmatprep.subr.mxu0 0.0
    %949 = vmatpush1.msra.mxu0 0.0
    %950 = vmatprep.subr.mxu0 0.0
    %951 = vmatpush1.msra.mxu0 0.0
    %952 = vmatprep.subr.mxu0 0.0
    %953 = vmatpush1.msra.mxu0 0.0
    %954 = vmatprep.subr.mxu0 0.0
    %955 = vmatpush1.msra.mxu0 0.0
    %956 = vmatprep.subr.mxu0 0.0
    %957 = vmatpush1.msra.mxu0 0.0
    %958 = vmatprep.subr.mxu0 0.0
    %959 = vmatpush1.msra.mxu0 0.0
    %960 = vmatprep.subr.mxu0 0.0
    %961 = vmatpush1.msra.mxu0 0.0
    %962 = vmatprep.subr.mxu0 0.0
    %963 = vmatpush1.msra.mxu0 0.0
    %964 = vmatprep.subr.mxu0 0.0
    %965 = vmatpush1.msra.mxu0 0.0
    %966 = vmatprep.subr.mxu0 0.0
    %967 = vmatpush1.msra.mxu0 0.0
    %968 = vmatprep.mubr.f32.mxu0 0.0
    %969 = vmatmul.mubr.f32.gmra.mrb[0].mxu0 %v902
    %v970 = vpop.f32.mrb[0].mxu0
    %v971 = vadd.f32 0.0, %v970
    %v972 = vpop.f32.mrb[0].mxu0
    %v973 = vadd.f32 0.0, %v972
    %974 = vdwg.mxu0
    %v975 = vld [vmem:[%s6] sm:$0xff]
    %977 = vset.pattern.permute.xlu0 0
    %978 = vperm.xlu0 %977, %v975
    %v979 = vpop.permute.xlu0 %978
    %981 = vmatprep.subr.mxu0 %v898
    %982 = vmatpush1.msra.mxu0 %v897
    %983 = vmatprep.subr.mxu0 0.0
    %984 = vmatpush1.msra.mxu0 0.0
    %985 = vmatprep.subr.mxu0 0.0
    %986 = vmatpush1.msra.mxu0 0.0
    %987 = vmatprep.subr.mxu0 0.0
    %988 = vmatpush1.msra.mxu0 0.0
    %989 = vmatprep.subr.mxu0 0.0
    %990 = vmatpush1.msra.mxu0 0.0
    %991 = vmatprep.subr.mxu0 0.0
    %992 = vmatpush1.msra.mxu0 0.0
    %993 = vmatprep.subr.mxu0 0.0
    %994 = vmatpush1.msra.mxu0 0.0
    %995 = vmatprep.subr.mxu0 0.0
    %996 = vmatpush1.msra.mxu0 0.0
    %997 = vmatprep.subr.mxu0 0.0
    %998 = vmatpush1.msra.mxu0 0.0
    %999 = vmatprep.subr.mxu0 0.0
    %1000 = vmatpush1.msra.mxu0 0.0
    %1001 = vmatprep.subr.mxu0 0.0
    %1002 = vmatpush1.msra.mxu0 0.0
    %1003 = vmatprep.subr.mxu0 0.0
    %1004 = vmatpush1.msra.mxu0 0.0
    %1005 = vmatprep.subr.mxu0 0.0
    %1006 = vmatpush1.msra.mxu0 0.0
    %1007 = vmatprep.subr.mxu0 0.0
    %1008 = vmatpush1.msra.mxu0 0.0
    %1009 = vmatprep.subr.mxu0 0.0
    %1010 = vmatpush1.msra.mxu0 0.0
    %1011 = vmatprep.subr.mxu0 0.0
    %1012 = vmatpush1.msra.mxu0 0.0
    %1013 = vmatprep.subr.mxu0 0.0
    %1014 = vmatpush1.msra.mxu0 0.0
    %1015 = vmatprep.subr.mxu0 0.0
    %1016 = vmatpush1.msra.mxu0 0.0
    %1017 = vmatprep.subr.mxu0 0.0
    %1018 = vmatpush1.msra.mxu0 0.0
    %1019 = vmatprep.subr.mxu0 0.0
    %1020 = vmatpush1.msra.mxu0 0.0
    %1021 = vmatprep.subr.mxu0 0.0
    %1022 = vmatpush1.msra.mxu0 0.0
    %1023 = vmatprep.subr.mxu0 0.0
    %1024 = vmatpush1.msra.mxu0 0.0
    %1025 = vmatprep.subr.mxu0 0.0
    %1026 = vmatpush1.msra.mxu0 0.0
    %1027 = vmatprep.subr.mxu0 0.0
    %1028 = vmatpush1.msra.mxu0 0.0
    %1029 = vmatprep.subr.mxu0 0.0
    %1030 = vmatpush1.msra.mxu0 0.0
    %1031 = vmatprep.subr.mxu0 0.0
    %1032 = vmatpush1.msra.mxu0 0.0
    %1033 = vmatprep.subr.mxu0 0.0
    %1034 = vmatpush1.msra.mxu0 0.0
    %1035 = vmatprep.subr.mxu0 0.0
    %1036 = vmatpush1.msra.mxu0 0.0
    %1037 = vmatprep.subr.mxu0 0.0
    %1038 = vmatpush1.msra.mxu0 0.0
    %1039 = vmatprep.subr.mxu0 0.0
    %1040 = vmatpush1.msra.mxu0 0.0
    %1041 = vmatprep.subr.mxu0 0.0
    %1042 = vmatpush1.msra.mxu0 0.0
    %1043 = vmatprep.subr.mxu0 0.0
    %1044 = vmatpush1.msra.mxu0 0.0
    %1045 = vmatprep.mubr.f32.mxu0 0.0
    %1046 = vmatmul.mubr.f32.gmra.mrb[0].mxu0 %v902
    %v1047 = vpop.f32.mrb[0].mxu0
    %v1048 = vadd.f32 %v979, %v1047
    %v1049 = vpop.f32.mrb[0].mxu0
    %v1050 = vadd.f32 %v979, %v1049
    %1051 = vdwg.mxu0
    %v1052 = vand.u32 2147483647, %v971
    %v1053 = vand.u32 2147483647, %v973
    %v1054 = vadd.f32 %v1052, 1.0
    %v1055 = vadd.f32 %v1053, 1.0
    %v1056 = vmul.f32 %v1054, 3.0
    %v1057 = vmul.f32 %v1055, 3.0
    %v1058 = vrcp.pop %v1056
    %v1059 = vmul.f32 %v971, %v1058
    %v1060 = vrcp.pop %v1057
    %v1061 = vmul.f32 %v973, %v1060
    %v1062 = vadd.f32 %v1048, %v1059
    %v1063 = vadd.f32 %v1050, %v1061
    %v1066 = vrot.slane %v1062, 7
    %v1067 = vrot.slane %v1063, 7
    %vm1070 = vcmp.gt.f32.partialorder %v1062, %v1066
    %vm1071 = vcmp.gt.f32.partialorder %v1063, %v1067
    %v1072 = vsel %vm1070, %v1062, %v1066
    %v1073 = vsel %vm1071, %v1063, %v1067
    %v1074 = vsel %vm1070, 1, 0
    %v1075 = vsel %vm1071, 1, 0
    %v1078 = vrot.slane %v1072, 7
    %v1079 = vrot.slane %v1073, 7
    %vm1082 = vcmp.gt.f32.partialorder %v1062, %v1078
    %vm1083 = vcmp.gt.f32.partialorder %v1063, %v1079
    %v1084 = vrot.slane %v1074, 7
    %v1085 = vrot.slane %v1075, 7
    %v1086 = vsel %vm1082, 2, %v1084
    %v1087 = vsel %vm1083, 2, %v1085
    %vm1088 = vcmp.eq.s32.totalorder %v1086, 1
    %vm1089 = vcmp.eq.s32.totalorder %v1087, 1
    %v1090 = vsel %vm1088, 7, 3
    %v1091 = vsel %vm1089, 7, 3
    %vm1092 = vcmp.eq.s32.totalorder %v1086, 2
    %vm1093 = vcmp.eq.s32.totalorder %v1087, 2
    %v1094 = vsel %vm1092, 11, %v1090
    %v1095 = vsel %vm1093, 11, %v1091
    %v1096 = vcombine.low %v1094, %v1095
    %v1098 = vunpack.c.l.s4 1966171168
    %v1099 = vunpack.c.0.s8 %v1098
    %v1100 = vlaneseq
    %v1101 = vshrl.u32 %v1100, 7
    %v1102 = vsub.s32 %v1099, %v1101
    %v1103 = vrot.slane %v1096, %v1102
    %v1105 = vunpack.c.l.s4 1966171168
    %v1106 = vunpack.c.0.s8 %v1105
    %v1107 = vlaneseq
    %v1108 = vshrl.u32 %v1107, 7
    %v1109 = vsub.s32 %v1106, %v1108
    %v1110 = vrot.slane %v1103, %v1109
    %v1111 = vcombine.high %v1110, %v1110
    %v1112 = vlaneseq
    %vm1113 = vcmp.ge.s32.totalorder %v1112, 0
    %vm1114 = vcmp.lt.s32.totalorder %v1112, 256
    %vm1115 = vmand %vm1113, %vm1114
    %1116 = vst.msk [vmem:[#allocation2] sm:$0x3] %vm1115, %v1111
    // Predicated region
    $region30: #{tpu_custom_call.1} parent=1 // pred_check
      _
    $region31: #{tpu_custom_call.1} parent=1 // pred_check_branch
      %1118 = sbr.rel (0) target = $region33
    $region32: #{tpu_custom_call.1} parent=1 // pred_region
      %s1120 = ssub.s32 32, 32
      %1121 = vsyncadd [#allocation3], %s1120
      %s1123 = sshll.u32 [#allocation2], 4
      %s1124 = int_to_ptr.vmem [resolvable:$true] %s1123
      %1126 = dma.vmem_to_hbm [thread:$0]  %s1124, 32, %s7, [#allocation3]
    $region33: #{tpu_custom_call.1} parent=1 // pred_fallthru
      _
    // Predicated region
    $region34: #{tpu_custom_call.1} parent=1 // pred_check
      _
    $region35: #{tpu_custom_call.1} parent=1 // pred_check_branch
      %1128 = sbr.rel (0) target = $region37
    $region36: #{tpu_custom_call.1} parent=1 // pred_region
      %1129 = dma.done [#allocation3], 32
    $region37: #{tpu_custom_call.1} parent=1 // pred_fallthru
      _
    %1130 = vsyncpa [#allocation3], 1

</llo_original>
